<compile_context>
chip_gen: v6e
topology: v6e:2x2x1
jax: 0.10.0
libtpu: 0.0.40
codegen_flags: <defaults>
</compile_context>

<pallas_src>
from functools import partial

import jax
import jax.numpy as jnp
from jax.experimental import pallas as pl
from jax.experimental.pallas import tpu as pltpu

LANE = 128
NEG_INF = -1e30


def _round_up(x, m):
    return ((x + m - 1) // m) * m


def _num_tensorcores():
    """2 on v7x (dual TensorCore), else 1. Safe fallback for interpret/CPU."""
    try:
        kind = jax.devices()[0].device_kind.lower()
        return 2 if "v7" in kind else 1
    except Exception:  # pragma: no cover
        return 1


def actor_kernel(x_ref, w1_ref, b1_ref, w2_ref, b2_ref, w3_ref, b3_ref, o_ref):
    # fc1 + ReLU: bf16 MXU operands, f32 accumulate, f32 elementwise.
    x = x_ref[...].astype(jnp.bfloat16)          # no-op if caller passes bf16
    h1 = jnp.dot(x, w1_ref[...], preferred_element_type=jnp.float32)
    h1 = jnp.maximum(h1 + b1_ref[...], 0.0)

    # fc2 + ReLU
    h2 = jnp.dot(h1.astype(jnp.bfloat16), w2_ref[...],
                 preferred_element_type=jnp.float32)
    h2 = jnp.maximum(h2 + b2_ref[...], 0.0)

    # pi head in f32 (tiny matmul; kernel is mem-bound so this is free).
    # Padded action lanes carry a -1e30 bias so they vanish under exp().
    logits = jnp.dot(h2, w3_ref[...], preferred_element_type=jnp.float32) + b3_ref[...]

    # Exact softmax over the 128-lane padded action axis.
    m = jnp.max(logits, axis=1, keepdims=True)
    e = jnp.exp(logits - m)
    denom = jnp.sum(e, axis=1, keepdims=True)
    probs = e / denom                            # exact divide (row sums == 1)

    # Narrow store: only the real action lanes go back to HBM (8x fewer bytes).
    o_ref[...] = probs[:, : o_ref.shape[1]].astype(o_ref.dtype)


def init_params(key, input_size, fc1_dims, fc2_dims, action_dim):
    """f32 params mimicking nn.Linear's U(-1/sqrt(fan_in), 1/sqrt(fan_in)),
    stored as (in_features, out_features) so the kernel computes x @ W + b."""
    ks = jax.random.split(key, 6)

    def linear(kw, kb, fan_in, fan_out):
        bound = 1.0 / jnp.sqrt(fan_in)
        w = jax.random.uniform(kw, (fan_in, fan_out), jnp.float32, -bound, bound)
        b = jax.random.uniform(kb, (1, fan_out), jnp.float32, -bound, bound)
        return w, b

    w1, b1 = linear(ks[0], ks[1], input_size, fc1_dims)
    w2, b2 = linear(ks[2], ks[3], fc1_dims, fc2_dims)
    w3, b3 = linear(ks[4], ks[5], fc2_dims, action_dim)
    return {"w1": w1, "b1": b1, "w2": w2, "b2": b2, "w3": w3, "b3": b3}


def prepare_params(raw):
    """One-time prep: pad feature axes to multiples of 128 lanes. fc1/fc2
    weights are stored bf16 (MXU operands); the tiny pi-head weight stays f32
    for accuracy. Padded pi-bias lanes are -1e30 so they never contribute to
    the softmax."""
    w1, b1 = raw["w1"], raw["b1"]
    w2, b2 = raw["w2"], raw["b2"]
    w3, b3 = raw["w3"], raw["b3"]

    in_dim, d1 = w1.shape
    d2 = w2.shape[1]
    a = w3.shape[1]
    d1p, d2p, ap = _round_up(d1, LANE), _round_up(d2, LANE), _round_up(a, LANE)

    def pad2(x, rows, cols, fill=0.0):
        out = jnp.full((rows, cols), fill, jnp.float32)
        return out.at[: x.shape[0], : x.shape[1]].set(x)

    return {
        "w1": pad2(w1, in_dim, d1p).astype(jnp.bfloat16),
        "b1": pad2(b1, 1, d1p),
        "w2": pad2(w2, d1p, d2p).astype(jnp.bfloat16),
        "b2": pad2(b2, 1, d2p),
        "w3": pad2(w3, d2p, ap),            # f32: tiny, keeps log-probs accurate
        "b3": pad2(b3, 1, ap, fill=NEG_INF),
    }


@partial(jax.jit, static_argnames=("action_dim",))
def actor_forward(state, params, *, action_dim):
    """state: (B, input_size) f32 or bf16. params: output of prepare_params.
    Returns softmax action probabilities (B, action_dim) f32."""
    w1, b1 = params["w1"], params["b1"]
    w2, b2 = params["w2"], params["b2"]
    w3, b3 = params["w3"], params["b3"]

    B, in_dim = state.shape
    d1p, d2p, ap = w1.shape[1], w2.shape[1], w3.shape[1]

    # Batch tiling: fewest grid steps with TB <= 2048 (amortize ~0.35us/step
    # pipeline overhead on single-TC v5e/v6e); on v7x keep >= 2 tiles for big
    # batches so both TensorCores get work. TB from an even split rounded to 8
    # rows -> minimal padded-row waste for awkward batch sizes.
    TB_MAX = 2048
    n_tc = _num_tensorcores()
    grid = max(pl.cdiv(B, TB_MAX), n_tc if B >= 1024 else 1)
    TB = _round_up(pl.cdiv(B, grid), 8)
    Bp = TB * grid
    if Bp != B:
        state = jnp.pad(state, ((0, Bp - B), (0, 0)))

    x_bytes = Bp * in_dim * state.dtype.itemsize
    w_bytes = sum(int(a.size) * a.dtype.itemsize for a in (w1, b1, w2, b2, w3, b3))
    cost = pl.CostEstimate(
        flops=2 * Bp * (in_dim * d1p + d1p * d2p + d2p * ap),
        transcendentals=Bp * ap,
        bytes_accessed=x_bytes + Bp * action_dim * 4 + w_bytes,
    )

    out = pl.pallas_call(
        actor_kernel,
        out_shape=jax.ShapeDtypeStruct((Bp, action_dim), jnp.float32),
        grid_spec=pltpu.PrefetchScalarGridSpec(
            num_scalar_prefetch=0,
            grid=(grid,),
            in_specs=[
                pl.BlockSpec((TB, in_dim), lambda i: (i, 0)),   # activations: tiled
                pl.BlockSpec((in_dim, d1p), lambda i: (0, 0)),  # weights: VMEM-resident
                pl.BlockSpec((1, d1p), lambda i: (0, 0)),
                pl.BlockSpec((d1p, d2p), lambda i: (0, 0)),
                pl.BlockSpec((1, d2p), lambda i: (0, 0)),
                pl.BlockSpec((d2p, ap), lambda i: (0, 0)),
                pl.BlockSpec((1, ap), lambda i: (0, 0)),
            ],
            # Narrow f32 output: last dim equals the full array dim, so the
            # (TB, action_dim) block is legal; 8x less writeback than padded.
            out_specs=pl.BlockSpec((TB, action_dim), lambda i: (i, 0)),
        ),
        compiler_params=pltpu.CompilerParams(
            dimension_semantics=("parallel",)),
        cost_estimate=cost,
    )(state, w1, b1, w2, b2, w3, b3)

    return out[:B]


if __name__ == "__main__":
    # Small shapes consistent with the module's forward:
    # batch=8, input_size=32, fc1_dims=64, fc2_dims=64, action_dim=16
    B, input_size, fc1_dims, fc2_dims, action_dim = 8, 32, 64, 64, 16

    key = jax.random.PRNGKey(0)
    k_state, k_params = jax.random.split(key)
    state = jax.random.normal(k_state, (B, input_size), jnp.float32)

    raw = init_params(k_params, input_size, fc1_dims, fc2_dims, action_dim)
    params = prepare_params(raw)

    mu = actor_forward(state, params, action_dim=action_dim)
    mu = jax.block_until_ready(mu)

    # Pure-JAX f32 reference (same math as the PyTorch forward).
    h1 = jnp.maximum(state @ raw["w1"] + raw["b1"], 0.0)
    h2 = jnp.maximum(h1 @ raw["w2"] + raw["b2"], 0.0)
    ref = jax.nn.softmax(h2 @ raw["w3"] + raw["b3"], axis=1)

    assert mu.shape == (B, action_dim)
    # bf16 MXU operands on fc1/fc2 -> loosened element tolerance.
    assert jnp.allclose(mu, ref, atol=2e-2, rtol=2e-2), float(jnp.max(jnp.abs(mu - ref)))
    # Exact divide in the kernel -> rows sum to 1 to f32 rounding.
    assert jnp.allclose(jnp.sum(mu, axis=1), 1.0, atol=1e-3)
    assert bool(jnp.all(mu >= 0.0))

    # Awkward larger batch to exercise padding + the multi-tile grid path.
    B2 = 1537
    state2 = jax.random.normal(jax.random.PRNGKey(1), (B2, input_size), jnp.float32)
    mu2 = jax.block_until_ready(actor_forward(state2, params, action_dim=action_dim))
    assert mu2.shape == (B2, action_dim)
    assert jnp.allclose(jnp.sum(mu2, axis=1), 1.0, atol=1e-3)

    print("KERNEL_OK")
</pallas_src>

<mosaic_0001>
module attributes {stable_mosaic.version = 11 : i64} {
  func.func @actor_kernel(%arg0: i32, %arg1: memref<8x32xf32, #tpu.memory_space<vmem>>, %arg2: memref<32x128xbf16, #tpu.memory_space<vmem>>, %arg3: memref<1x128xf32, #tpu.memory_space<vmem>>, %arg4: memref<128x128xbf16, #tpu.memory_space<vmem>>, %arg5: memref<1x128xf32, #tpu.memory_space<vmem>>, %arg6: memref<128x128xf32, #tpu.memory_space<vmem>>, %arg7: memref<1x128xf32, #tpu.memory_space<vmem>>, %arg8: memref<8x16xf32, #tpu.memory_space<vmem>>) attributes {dimension_semantics = [#tpu.dimension_semantics<parallel>], iteration_bounds = array<i64: 1>, scalar_prefetch = 0 : i64, scratch_operands = 0 : i64, tpu.core_type = #tpu.core_type<tc>, window_params = [{transform_indices = @transform_0, window_bounds = array<i64: 8, 32>}, {pipeline_mode = #tpu.pipeline_mode<synchronous>, transform_indices = @transform_1, window_bounds = array<i64: 32, 128>}, {pipeline_mode = #tpu.pipeline_mode<synchronous>, transform_indices = @transform_2, window_bounds = array<i64: 1, 128>}, {pipeline_mode = #tpu.pipeline_mode<synchronous>, transform_indices = @transform_3, window_bounds = array<i64: 128, 128>}, {pipeline_mode = #tpu.pipeline_mode<synchronous>, transform_indices = @transform_4, window_bounds = array<i64: 1, 128>}, {pipeline_mode = #tpu.pipeline_mode<synchronous>, transform_indices = @transform_5, window_bounds = array<i64: 128, 128>}, {pipeline_mode = #tpu.pipeline_mode<synchronous>, transform_indices = @transform_6, window_bounds = array<i64: 1, 128>}, {transform_indices = @transform_7, window_bounds = array<i64: 8, 16>}]} {
    %c0 = arith.constant 0 : index
    %c0_0 = arith.constant 0 : index
    %0 = vector.load %arg1[%c0, %c0_0] : memref<8x32xf32, #tpu.memory_space<vmem>>, vector<8x32xf32>
    %1 = arith.truncf %0 : vector<8x32xf32> to vector<8x32xbf16>
    %c0_1 = arith.constant 0 : index
    %c0_2 = arith.constant 0 : index
    %2 = vector.load %arg2[%c0_1, %c0_2] : memref<32x128xbf16, #tpu.memory_space<vmem>>, vector<32x128xbf16>
    %cst = arith.constant dense<0.000000e+00> : vector<8x128xf32>
    %3 = tpu.matmul %1, %2, %cst {dimension_numbers = #tpu.dot_dimension_numbers<[1], [0], [0], [1], [0, 0, 1, 1], [], []>} : vector<8x32xbf16>, vector<32x128xbf16>, vector<8x128xf32> -> vector<8x128xf32>
    %c0_3 = arith.constant 0 : index
    %c0_4 = arith.constant 0 : index
    %4 = vector.load %arg3[%c0_3, %c0_4] : memref<1x128xf32, #tpu.memory_space<vmem>>, vector<1x128xf32>
    %5 = vector.broadcast %4 : vector<1x128xf32> to vector<8x128xf32>
    %6 = arith.addf %3, %5 : vector<8x128xf32>
    %cst_5 = arith.constant 0.000000e+00 : f32
    %7 = vector.broadcast %cst_5 : f32 to vector<8x128xf32>
    %8 = arith.maximumf %6, %7 : vector<8x128xf32>
    %9 = arith.truncf %8 : vector<8x128xf32> to vector<8x128xbf16>
    %c0_6 = arith.constant 0 : index
    %c0_7 = arith.constant 0 : index
    %10 = vector.load %arg4[%c0_6, %c0_7] : memref<128x128xbf16, #tpu.memory_space<vmem>>, vector<128x128xbf16>
    %cst_8 = arith.constant dense<0.000000e+00> : vector<8x128xf32>
    %11 = tpu.matmul %9, %10, %cst_8 {dimension_numbers = #tpu.dot_dimension_numbers<[1], [0], [0], [1], [0, 0, 1, 1], [], []>} : vector<8x128xbf16>, vector<128x128xbf16>, vector<8x128xf32> -> vector<8x128xf32>
    %c0_9 = arith.constant 0 : index
    %c0_10 = arith.constant 0 : index
    %12 = vector.load %arg5[%c0_9, %c0_10] : memref<1x128xf32, #tpu.memory_space<vmem>>, vector<1x128xf32>
    %13 = vector.broadcast %12 : vector<1x128xf32> to vector<8x128xf32>
    %14 = arith.addf %11, %13 : vector<8x128xf32>
    %cst_11 = arith.constant 0.000000e+00 : f32
    %15 = vector.broadcast %cst_11 : f32 to vector<8x128xf32>
    %16 = arith.maximumf %14, %15 : vector<8x128xf32>
    %c0_12 = arith.constant 0 : index
    %c0_13 = arith.constant 0 : index
    %17 = vector.load %arg6[%c0_12, %c0_13] : memref<128x128xf32, #tpu.memory_space<vmem>>, vector<128x128xf32>
    %cst_14 = arith.constant dense<0.000000e+00> : vector<8x128xf32>
    %18 = tpu.matmul %16, %17, %cst_14 {dimension_numbers = #tpu.dot_dimension_numbers<[1], [0], [0], [1], [0, 0, 1, 1], [], []>} : vector<8x128xf32>, vector<128x128xf32>, vector<8x128xf32> -> vector<8x128xf32>
    %c0_15 = arith.constant 0 : index
    %c0_16 = arith.constant 0 : index
    %19 = vector.load %arg7[%c0_15, %c0_16] : memref<1x128xf32, #tpu.memory_space<vmem>>, vector<1x128xf32>
    %20 = vector.broadcast %19 : vector<1x128xf32> to vector<8x128xf32>
    %21 = arith.addf %18, %20 : vector<8x128xf32>
    %cst_17 = arith.constant dense<0xFF800000> : vector<8xf32>
    %22 = vector.multi_reduction <maximumf>, %21, %cst_17 [1] : vector<8x128xf32> to vector<8xf32>
    %23 = vector.shape_cast %22 : vector<8xf32> to vector<8x1xf32>
    %24 = vector.broadcast %23 : vector<8x1xf32> to vector<8x128xf32>
    %25 = arith.subf %21, %24 : vector<8x128xf32>
    %26 = math.exp %25 : vector<8x128xf32>
    %cst_18 = arith.constant dense<0.000000e+00> : vector<8xf32>
    %27 = vector.multi_reduction <add>, %26, %cst_18 [1] : vector<8x128xf32> to vector<8xf32>
    %28 = vector.shape_cast %27 : vector<8xf32> to vector<8x1xf32>
    %29 = vector.broadcast %28 : vector<8x1xf32> to vector<8x128xf32>
    %30 = arith.divf %26, %29 : vector<8x128xf32>
    %31 = vector.extract_strided_slice %30 {offsets = [0, 0], sizes = [8, 16], strides = [1, 1]} : vector<8x128xf32> to vector<8x16xf32>
    %c0_19 = arith.constant 0 : index
    %c0_20 = arith.constant 0 : index
    %32 = vector.load %arg8[%c0_19, %c0_20] : memref<8x16xf32, #tpu.memory_space<vmem>>, vector<8x16xf32>
    tpu.vector_store %arg8[%c0_19, %c0_20], %31 {strides = array<i32>} : memref<8x16xf32, #tpu.memory_space<vmem>>, vector<8x16xf32>,
    return
  }
  func.func @transform_0(%arg0: i32) -> (i32, i32) {
    %c0_i32 = arith.constant 0 : i32
    %c0_i32_0 = arith.constant 0 : i32
    return %arg0, %c0_i32 : i32, i32
  }
  func.func @transform_1(%arg0: i32) -> (i32, i32) {
    %c0_i32 = arith.constant 0 : i32
    %c0_i32_0 = arith.constant 0 : i32
    %c0_i32_1 = arith.constant 0 : i32
    return %c0_i32, %c0_i32_0 : i32, i32
  }
  func.func @transform_2(%arg0: i32) -> (i32, i32) {
    %c0_i32 = arith.constant 0 : i32
    %c0_i32_0 = arith.constant 0 : i32
    %c0_i32_1 = arith.constant 0 : i32
    return %c0_i32, %c0_i32_0 : i32, i32
  }
  func.func @transform_3(%arg0: i32) -> (i32, i32) {
    %c0_i32 = arith.constant 0 : i32
    %c0_i32_0 = arith.constant 0 : i32
    %c0_i32_1 = arith.constant 0 : i32
    return %c0_i32, %c0_i32_0 : i32, i32
  }
  func.func @transform_4(%arg0: i32) -> (i32, i32) {
    %c0_i32 = arith.constant 0 : i32
    %c0_i32_0 = arith.constant 0 : i32
    %c0_i32_1 = arith.constant 0 : i32
    return %c0_i32, %c0_i32_0 : i32, i32
  }
  func.func @transform_5(%arg0: i32) -> (i32, i32) {
    %c0_i32 = arith.constant 0 : i32
    %c0_i32_0 = arith.constant 0 : i32
    %c0_i32_1 = arith.constant 0 : i32
    return %c0_i32, %c0_i32_0 : i32, i32
  }
  func.func @transform_6(%arg0: i32) -> (i32, i32) {
    %c0_i32 = arith.constant 0 : i32
    %c0_i32_0 = arith.constant 0 : i32
    %c0_i32_1 = arith.constant 0 : i32
    return %c0_i32, %c0_i32_0 : i32, i32
  }
  func.func @transform_7(%arg0: i32) -> (i32, i32) {
    %c0_i32 = arith.constant 0 : i32
    %c0_i32_0 = arith.constant 0 : i32
    return %arg0, %c0_i32 : i32, i32
  }
}

</mosaic_0001>

<llo_original>
// kernel: actor_forward.1
$region0: #{actor_forward.1}
  #allocation0 [shape = 'u32[]', space=smem, size = 0x4, offset = 0x4, fixed_abs, tag = 'smem constant byte address 0x4 - core index']
  #allocation1 [shape = 'u32[144,128]{1,0:T(1,128)}', space=vmem, size = 0x12000, scoped, tag = 'internal scratch']
  %s0 = inlined_call_operand.hbm [shape: f32[8,32], index: 0, kind: input, shape index: {}]
  %s1 = inlined_call_operand.hbm [shape: bf16[32,128], index: 1, kind: input, shape index: {}]
  %s2 = inlined_call_operand.vmem [shape: f32[1,128], index: 2, kind: input, shape index: {}]
  %s3 = inlined_call_operand.hbm [shape: bf16[128,128], index: 3, kind: input, shape index: {}]
  %s4 = inlined_call_operand.vmem [shape: f32[1,128], index: 4, kind: input, shape index: {}]
  %s5 = inlined_call_operand.hbm [shape: f32[128,128], index: 5, kind: input, shape index: {}]
  %s6 = inlined_call_operand.vmem [shape: f32[1,128], index: 6, kind: input, shape index: {}]
  %s7 = inlined_call_operand.hbm [shape: f32[8,16], index: 7, kind: output, shape index: {}]
  %s8 = sld [smem:[#allocation0]]
  $region54: #{actor_forward.1} parent=0
    _
  %s10 = ssub.s32 1, %s8
  %s11 = scalar_select 0, %s10, %s8
  $region1: #{actor_forward.1} parent=0
    #allocation2 [shape = 'u8[4096]{0}', space=vmem, size = 0x1000, scoped, tag = 'input window, operand 0, single buffered']
    #allocation3 [shape = 's32[1]{0}', space=sflag, size = 0x4, scoped, tag = 'scoped memory for actor_forward.1']
    #allocation4 [shape = 's32[1]{0}', space=sflag, size = 0x4, scoped, tag = 'scoped memory for actor_forward.1']
    #allocation5 [shape = 'u8[8192]{0}', space=vmem, size = 0x2000, scoped, tag = 'input window, operand 1, single buffered']
    #allocation6 [shape = 's32[1]{0}', space=sflag, size = 0x4, scoped, tag = 'scoped memory for actor_forward.1']
    #allocation7 [shape = 'u8[32768]{0}', space=vmem, size = 0x8000, scoped, tag = 'input window, operand 3, single buffered']
    #allocation8 [shape = 'u8[65536]{0}', space=vmem, size = 0x10000, scoped, tag = 'input window, operand 5, single buffered']
    #allocation9 [shape = 's32[1]{0}', space=sflag, size = 0x4, scoped, tag = 'scoped memory for actor_forward.1']
    #allocation10 [shape = 'u8[4096]{0}', space=vmem, size = 0x1000, scoped, tag = 'output window, operand 0, single buffered']
    %12 = vsyncpa [#allocation3], 0
    %13 = vsyncpa [#allocation6], 0
    %14 = vsyncpa [#allocation9], 0
    %15 = vsyncpa [#allocation4], 0
    // Predicated region
    $region2: #{actor_forward.1} parent=1 // pred_check
      _
    $region3: #{actor_forward.1} parent=1 // pred_check_branch
      %17 = sbr.rel (0) target = $region5
    $region4: #{actor_forward.1} parent=1 // pred_region
      %s19 = ssub.s32 128, 128
      %20 = vsyncadd [#allocation3], %s19
      %s22 = sshll.u32 [#allocation2], 4
      %s23 = int_to_ptr.vmem [resolvable:$true] %s22
      %25 = dma.hbm_to_vmem [thread:$0]  %s0, 128, %s23, [#allocation3]
    $region5: #{actor_forward.1} parent=1 // pred_fallthru
      _
    // Predicated region
    $region6: #{actor_forward.1} parent=1 // pred_check
      _
    $region7: #{actor_forward.1} parent=1 // pred_check_branch
      %27 = sbr.rel (0) target = $region9
    $region8: #{actor_forward.1} parent=1 // pred_region
      %s29 = ssub.s32 256, 256
      %30 = vsyncadd [#allocation6], %s29
      %s31 = sshll.u32 [#allocation5], 4
      %s32 = int_to_ptr.vmem [resolvable:$true] %s31
      %37 = dma.hbm_to_vmem [thread:$0]  %s1, 256, %s32, [#allocation6], 64, 64, 4
    $region9: #{actor_forward.1} parent=1 // pred_fallthru
      _
    // Predicated region
    $region10: #{actor_forward.1} parent=1 // pred_check
      _
    $region11: #{actor_forward.1} parent=1 // pred_check_branch
      %39 = sbr.rel (0) target = $region13
    $region12: #{actor_forward.1} parent=1 // pred_region
      _
    $region13: #{actor_forward.1} parent=1 // pred_fallthru
      _
    // Predicated region
    $region14: #{actor_forward.1} parent=1 // pred_check
      _
    $region15: #{actor_forward.1} parent=1 // pred_check_branch
      %41 = sbr.rel (0) target = $region17
    $region16: #{actor_forward.1} parent=1 // pred_region
      %s43 = ssub.s32 1024, 1024
      %44 = vsyncadd [#allocation6], %s43
      %s45 = sshll.u32 [#allocation7], 4
      %s46 = int_to_ptr.vmem [resolvable:$true] %s45
      %51 = dma.hbm_to_vmem [thread:$0]  %s3, 1024, %s46, [#allocation6], 64, 64, 4
    $region17: #{actor_forward.1} parent=1 // pred_fallthru
      _
    // Predicated region
    $region18: #{actor_forward.1} parent=1 // pred_check
      _
    $region19: #{actor_forward.1} parent=1 // pred_check_branch
      %53 = sbr.rel (0) target = $region21
    $region20: #{actor_forward.1} parent=1 // pred_region
      _
    $region21: #{actor_forward.1} parent=1 // pred_fallthru
      _
    // Predicated region
    $region22: #{actor_forward.1} parent=1 // pred_check
      _
    $region23: #{actor_forward.1} parent=1 // pred_check_branch
      %55 = sbr.rel (0) target = $region25
    $region24: #{actor_forward.1} parent=1 // pred_region
      %s57 = ssub.s32 2048, 2048
      %58 = vsyncadd [#allocation9], %s57
      %s59 = sshll.u32 [#allocation8], 4
      %s60 = int_to_ptr.vmem [resolvable:$true] %s59
      %65 = dma.hbm_to_vmem [thread:$0]  %s5, 2048, %s60, [#allocation9], 128, 128, 8
    $region25: #{actor_forward.1} parent=1 // pred_fallthru
      _
    // Predicated region
    $region26: #{actor_forward.1} parent=1 // pred_check
      _
    $region27: #{actor_forward.1} parent=1 // pred_check_branch
      %67 = sbr.rel (0) target = $region29
    $region28: #{actor_forward.1} parent=1 // pred_region
      _
    $region29: #{actor_forward.1} parent=1 // pred_fallthru
      _
    // Predicated region
    $region30: #{actor_forward.1} parent=1 // pred_check
      _
    $region31: #{actor_forward.1} parent=1 // pred_check_branch
      %69 = sbr.rel (0) target = $region33
    $region32: #{actor_forward.1} parent=1 // pred_region
      %70 = dma.done [#allocation3], 128
    $region33: #{actor_forward.1} parent=1 // pred_fallthru
      _
    // Predicated region
    $region34: #{actor_forward.1} parent=1 // pred_check
      _
    $region35: #{actor_forward.1} parent=1 // pred_check_branch
      %72 = sbr.rel (0) target = $region37
    $region36: #{actor_forward.1} parent=1 // pred_region
      %73 = dma.done [#allocation6], 256
    $region37: #{actor_forward.1} parent=1 // pred_fallthru
      _
    // Predicated region
    $region38: #{actor_forward.1} parent=1 // pred_check
      _
    $region39: #{actor_forward.1} parent=1 // pred_check_branch
      %75 = sbr.rel (0) target = $region41
    $region40: #{actor_forward.1} parent=1 // pred_region
      %76 = dma.done [#allocation6], 1024
    $region41: #{actor_forward.1} parent=1 // pred_fallthru
      _
    // Predicated region
    $region42: #{actor_forward.1} parent=1 // pred_check
      _
    $region43: #{actor_forward.1} parent=1 // pred_check_branch
      %78 = sbr.rel (0) target = $region45
    $region44: #{actor_forward.1} parent=1 // pred_region
      %79 = dma.done [#allocation9], 2048
    $region45: #{actor_forward.1} parent=1 // pred_fallthru
      _
    %v81 = vld [vmem:[#allocation2] sm:$0xff]
    %v82 = vpack.c.bf16 %v81, %v81
    %v83 = vld [vmem:[#allocation5] sm:$0xf]
    %v84 = vld [vmem:[#allocation5 + $0x4] sm:$0xf]
    %v85 = vld [vmem:[#allocation5 + $0x8] sm:$0xf]
    %v86 = vld [vmem:[#allocation5 + $0xc] sm:$0xf]
    %v87 = vld [vmem:[%s2] sm:$0x1]
    %v89 = vlaneseq
    %v90 = vshrl.u32 %v89, 7
    %v91 = vsub.s32 0, %v90
    %v92 = vrot.slane %v87, %v91
    %v98 = vunpack.c.l.b16 %v83
    %v99 = vunpack.c.l.b16 %v84
    %v100 = vunpack.c.l.b16 %v85
    %v101 = vunpack.c.l.b16 %v86
    %v102 = vpack.c.b16 %v99, %v98
    %v103 = vpack.c.b16 %v101, %v100
    %vm106 = vcmask 261120
    %v108 = vsel %vm106, %v82, 0
    %110 = vmatprep.subr.bf16.mxu0 0
    %111 = vmatpush1.bf16.msra.mxu0 0
    %112 = vmatprep.subr.bf16.mxu0 0
    %113 = vmatpush1.bf16.msra.mxu0 0
    %114 = vmatprep.subr.bf16.mxu0 0
    %115 = vmatpush1.bf16.msra.mxu0 0
    %116 = vmatprep.subr.bf16.mxu0 0
    %117 = vmatpush1.bf16.msra.mxu0 0
    %118 = vmatprep.subr.bf16.mxu0 0
    %119 = vmatpush1.bf16.msra.mxu0 0
    %120 = vmatprep.subr.bf16.mxu0 0
    %121 = vmatpush1.bf16.msra.mxu0 0
    %122 = vmatprep.subr.bf16.mxu0 0
    %123 = vmatpush1.bf16.msra.mxu0 %v103
    %124 = vmatprep.subr.bf16.mxu0 0
    %125 = vmatpush1.bf16.msra.mxu0 %v102
    %126 = vmatprep.subr.bf16.mxu0 0
    %127 = vmatpush2.bf16.msra.mxu0 0
    %128 = vmatprep.subr.bf16.mxu0 0
    %129 = vmatpush2.bf16.msra.mxu0 0
    %130 = vmatprep.subr.bf16.mxu0 0
    %131 = vmatpush2.bf16.msra.mxu0 0
    %132 = vmatprep.subr.bf16.mxu0 0
    %133 = vmatpush2.bf16.msra.mxu0 0
    %134 = vmatprep.subr.bf16.mxu0 0
    %135 = vmatpush2.bf16.msra.mxu0 0
    %136 = vmatprep.subr.bf16.mxu0 0
    %137 = vmatpush2.bf16.msra.mxu0 0
    %138 = vmatprep.subr.bf16.mxu0 0
    %139 = vmatpush2.bf16.msra.mxu0 0
    %140 = vmatprep.subr.bf16.mxu0 0
    %141 = vmatpush2.bf16.msra.mxu0 0
    %142 = vmatprep.mubr.bf16.mxu0 0
    %143 = vmatmul.mubr.bf16.gmra.mxu0 %v108
    %v144 = vpop.f32.mrf.mxu0
    %v145 = vadd.f32 %v92, %v144
    %v146 = vpop.f32.mrf.mxu0
    %v147 = vpop.f32.mrf.mxu0
    %v148 = vpop.f32.mrf.mxu0
    %149 = vdwg.mxu0
    %v150 = vmax.f32 %v145, 0.0
    %v151 = vpack.c.bf16 %v150, %v150
    %v152 = vld [vmem:[#allocation7] sm:$0xf]
    %v153 = vld [vmem:[#allocation7 + $0x4] sm:$0xf]
    %v154 = vld [vmem:[#allocation7 + $0x8] sm:$0xf]
    %v155 = vld [vmem:[#allocation7 + $0xc] sm:$0xf]
    %v156 = vld [vmem:[#allocation7 + $0x10] sm:$0xf]
    %v157 = vld [vmem:[#allocation7 + $0x14] sm:$0xf]
    %v158 = vld [vmem:[#allocation7 + $0x18] sm:$0xf]
    %v159 = vld [vmem:[#allocation7 + $0x1c] sm:$0xf]
    %v160 = vld [vmem:[#allocation7 + $0x20] sm:$0xf]
    %v161 = vld [vmem:[#allocation7 + $0x24] sm:$0xf]
    %v162 = vld [vmem:[#allocation7 + $0x28] sm:$0xf]
    %v163 = vld [vmem:[#allocation7 + $0x2c] sm:$0xf]
    %v164 = vld [vmem:[#allocation7 + $0x30] sm:$0xf]
    %v165 = vld [vmem:[#allocation7 + $0x34] sm:$0xf]
    %v166 = vld [vmem:[#allocation7 + $0x38] sm:$0xf]
    %v167 = vld [vmem:[#allocation7 + $0x3c] sm:$0xf]
    %v168 = vld [vmem:[%s4] sm:$0x1]
    %v170 = vlaneseq
    %v171 = vshrl.u32 %v170, 7
    %v172 = vsub.s32 0, %v171
    %v173 = vrot.slane %v168, %v172
    %v191 = vunpack.c.l.b16 %v152
    %v192 = vunpack.c.l.b16 %v153
    %v193 = vunpack.c.l.b16 %v154
    %v194 = vunpack.c.l.b16 %v155
    %v195 = vunpack.c.l.b16 %v156
    %v196 = vunpack.c.l.b16 %v157
    %v197 = vunpack.c.l.b16 %v158
    %v198 = vunpack.c.l.b16 %v159
    %v199 = vunpack.c.l.b16 %v160
    %v200 = vunpack.c.l.b16 %v161
    %v201 = vunpack.c.l.b16 %v162
    %v202 = vunpack.c.l.b16 %v163
    %v203 = vunpack.c.l.b16 %v164
    %v204 = vunpack.c.l.b16 %v165
    %v205 = vunpack.c.l.b16 %v166
    %v206 = vunpack.c.l.b16 %v167
    %v207 = vpack.c.b16 %v192, %v191
    %v208 = vpack.c.b16 %v194, %v193
    %v209 = vpack.c.b16 %v196, %v195
    %v210 = vpack.c.b16 %v198, %v197
    %v211 = vpack.c.b16 %v200, %v199
    %v212 = vpack.c.b16 %v202, %v201
    %v213 = vpack.c.b16 %v204, %v203
    %v214 = vpack.c.b16 %v206, %v205
    %223 = vmatprep.subr.bf16.mxu0 0
    %224 = vmatpush1.bf16.msra.mxu0 %v214
    %225 = vmatprep.subr.bf16.mxu0 0
    %226 = vmatpush1.bf16.msra.mxu0 %v213
    %227 = vmatprep.subr.bf16.mxu0 0
    %228 = vmatpush1.bf16.msra.mxu0 %v212
    %229 = vmatprep.subr.bf16.mxu0 0
    %230 = vmatpush1.bf16.msra.mxu0 %v211
    %231 = vmatprep.subr.bf16.mxu0 0
    %232 = vmatpush1.bf16.msra.mxu0 %v210
    %233 = vmatprep.subr.bf16.mxu0 0
    %234 = vmatpush1.bf16.msra.mxu0 %v209
    %235 = vmatprep.subr.bf16.mxu0 0
    %236 = vmatpush1.bf16.msra.mxu0 %v208
    %237 = vmatprep.subr.bf16.mxu0 0
    %238 = vmatpush1.bf16.msra.mxu0 %v207
    %239 = vmatprep.subr.bf16.mxu0 0
    %240 = vmatpush2.bf16.msra.mxu0 0
    %241 = vmatprep.subr.bf16.mxu0 0
    %242 = vmatpush2.bf16.msra.mxu0 0
    %243 = vmatprep.subr.bf16.mxu0 0
    %244 = vmatpush2.bf16.msra.mxu0 0
    %245 = vmatprep.subr.bf16.mxu0 0
    %246 = vmatpush2.bf16.msra.mxu0 0
    %247 = vmatprep.subr.bf16.mxu0 0
    %248 = vmatpush2.bf16.msra.mxu0 0
    %249 = vmatprep.subr.bf16.mxu0 0
    %250 = vmatpush2.bf16.msra.mxu0 0
    %251 = vmatprep.subr.bf16.mxu0 0
    %252 = vmatpush2.bf16.msra.mxu0 0
    %253 = vmatprep.subr.bf16.mxu0 0
    %254 = vmatpush2.bf16.msra.mxu0 0
    %255 = vmatprep.mubr.bf16.mxu0 0
    %256 = vmatmul.mubr.bf16.gmra.mxu0 %v151
    %v257 = vpop.f32.mrf.mxu0
    %v258 = vadd.f32 %v173, %v257
    %v259 = vpop.f32.mrf.mxu0
    %v260 = vpop.f32.mrf.mxu0
    %v261 = vpop.f32.mrf.mxu0
    %262 = vdwg.mxu0
    %v263 = vmax.f32 %v258, 0.0
    %v264 = vld [vmem:[#allocation8] sm:$0xff]
    %v265 = vld [vmem:[#allocation8 + $0x8] sm:$0xff]
    %v266 = vld [vmem:[#allocation8 + $0x10] sm:$0xff]
    %v267 = vld [vmem:[#allocation8 + $0x18] sm:$0xff]
    %v268 = vld [vmem:[#allocation8 + $0x20] sm:$0xff]
    %v269 = vld [vmem:[#allocation8 + $0x28] sm:$0xff]
    %v270 = vld [vmem:[#allocation8 + $0x30] sm:$0xff]
    %v271 = vld [vmem:[#allocation8 + $0x38] sm:$0xff]
    %v272 = vld [vmem:[#allocation8 + $0x40] sm:$0xff]
    %v273 = vld [vmem:[#allocation8 + $0x48] sm:$0xff]
    %v274 = vld [vmem:[#allocation8 + $0x50] sm:$0xff]
    %v275 = vld [vmem:[#allocation8 + $0x58] sm:$0xff]
    %v276 = vld [vmem:[#allocation8 + $0x60] sm:$0xff]
    %v277 = vld [vmem:[#allocation8 + $0x68] sm:$0xff]
    %v278 = vld [vmem:[#allocation8 + $0x70] sm:$0xff]
    %v279 = vld [vmem:[#allocation8 + $0x78] sm:$0xff]
    %v280 = vld [vmem:[%s6] sm:$0x1]
    %v282 = vlaneseq
    %v283 = vshrl.u32 %v282, 7
    %v284 = vsub.s32 0, %v283
    %v285 = vrot.slane %v280, %v284
    %287 = vmatprep.subr.mxu0 0.0
    %288 = vmatpush1.msra.mxu0 %v279
    %289 = vmatprep.subr.mxu0 0.0
    %290 = vmatpush1.msra.mxu0 %v278
    %291 = vmatprep.subr.mxu0 0.0
    %292 = vmatpush1.msra.mxu0 %v277
    %293 = vmatprep.subr.mxu0 0.0
    %294 = vmatpush1.msra.mxu0 %v276
    %295 = vmatprep.subr.mxu0 0.0
    %296 = vmatpush1.msra.mxu0 %v275
    %297 = vmatprep.subr.mxu0 0.0
    %298 = vmatpush1.msra.mxu0 %v274
    %299 = vmatprep.subr.mxu0 0.0
    %300 = vmatpush1.msra.mxu0 %v273
    %301 = vmatprep.subr.mxu0 0.0
    %302 = vmatpush1.msra.mxu0 %v272
    %303 = vmatprep.subr.mxu0 0.0
    %304 = vmatpush1.msra.mxu0 %v271
    %305 = vmatprep.subr.mxu0 0.0
    %306 = vmatpush1.msra.mxu0 %v270
    %307 = vmatprep.subr.mxu0 0.0
    %308 = vmatpush1.msra.mxu0 %v269
    %309 = vmatprep.subr.mxu0 0.0
    %310 = vmatpush1.msra.mxu0 %v268
    %311 = vmatprep.subr.mxu0 0.0
    %312 = vmatpush1.msra.mxu0 %v267
    %313 = vmatprep.subr.mxu0 0.0
    %314 = vmatpush1.msra.mxu0 %v266
    %315 = vmatprep.subr.mxu0 0.0
    %316 = vmatpush1.msra.mxu0 %v265
    %317 = vmatprep.subr.mxu0 0.0
    %318 = vmatpush1.msra.mxu0 %v264
    %319 = vmatprep.subr.mxu0 0.0
    %320 = vmatpush2.msra.mxu0 0.0
    %321 = vmatprep.subr.mxu0 0.0
    %322 = vmatpush2.msra.mxu0 0.0
    %323 = vmatprep.subr.mxu0 0.0
    %324 = vmatpush2.msra.mxu0 0.0
    %325 = vmatprep.subr.mxu0 0.0
    %326 = vmatpush2.msra.mxu0 0.0
    %327 = vmatprep.subr.mxu0 0.0
    %328 = vmatpush2.msra.mxu0 0.0
    %329 = vmatprep.subr.mxu0 0.0
    %330 = vmatpush2.msra.mxu0 0.0
    %331 = vmatprep.subr.mxu0 0.0
    %332 = vmatpush2.msra.mxu0 0.0
    %333 = vmatprep.subr.mxu0 0.0
    %334 = vmatpush2.msra.mxu0 0.0
    %335 = vmatprep.subr.mxu0 0.0
    %336 = vmatpush2.msra.mxu0 0.0
    %337 = vmatprep.subr.mxu0 0.0
    %338 = vmatpush2.msra.mxu0 0.0
    %339 = vmatprep.subr.mxu0 0.0
    %340 = vmatpush2.msra.mxu0 0.0
    %341 = vmatprep.subr.mxu0 0.0
    %342 = vmatpush2.msra.mxu0 0.0
    %343 = vmatprep.subr.mxu0 0.0
    %344 = vmatpush2.msra.mxu0 0.0
    %345 = vmatprep.subr.mxu0 0.0
    %346 = vmatpush2.msra.mxu0 0.0
    %347 = vmatprep.subr.mxu0 0.0
    %348 = vmatpush2.msra.mxu0 0.0
    %349 = vmatprep.subr.mxu0 0.0
    %350 = vmatpush2.msra.mxu0 0.0
    %351 = vmatprep.mubr.f32.mxu0 0.0
    %352 = vmatmul.mubr.f32.gmra.mxu0 %v263
    %v353 = vpop.f32.mrf.mxu0
    %v354 = vadd.f32 %v285, %v353
    %v355 = vpop.f32.mrf.mxu0
    %356 = vdwg.mxu0
    %357 = vmax.xlane.f32.xlu0 %v354
    %v358 = vpop.xlane.xlu0 %357
    %v359 = vsub.f32 %v354, %v358
    %v360 = vmul.f32 %v359, 1.442695
    %v361 = vpow.pop %v360
    %362 = vadd.xlane.f32.xlu0 %v361
    %v363 = vpop.xlane.xlu0 %362
    %v364 = vrcp.pop %v363
    %v365 = vmul.f32 %v361, %v364
    %vm366 = vcmask 130048
    %367 = vst.msk [vmem:[#allocation10] sm:$0xff] %vm366, %v365
    // Predicated region
    $region46: #{actor_forward.1} parent=1 // pred_check
      _
    $region47: #{actor_forward.1} parent=1 // pred_check_branch
      %369 = sbr.rel (0) target = $region49
    $region48: #{actor_forward.1} parent=1 // pred_region
      %s371 = ssub.s32 128, 128
      %372 = vsyncadd [#allocation4], %s371
      %s374 = sshll.u32 [#allocation10], 4
      %s375 = int_to_ptr.vmem [resolvable:$true] %s374
      %377 = dma.vmem_to_hbm [thread:$0]  %s375, 128, %s7, [#allocation4]
    $region49: #{actor_forward.1} parent=1 // pred_fallthru
      _
    // Predicated region
    $region50: #{actor_forward.1} parent=1 // pred_check
      _
    $region51: #{actor_forward.1} parent=1 // pred_check_branch
      %379 = sbr.rel (0) target = $region53
    $region52: #{actor_forward.1} parent=1 // pred_region
      %380 = dma.done [#allocation4], 128
    $region53: #{actor_forward.1} parent=1 // pred_fallthru
      _
    %381 = vsyncpa [#allocation3], 1
    %382 = vsyncpa [#allocation6], 1
    %383 = vsyncpa [#allocation9], 1
    %384 = vsyncpa [#allocation4], 1

</llo_original>
